<compile_context>
chip_gen: v7x
topology: tpu7x:2x2x1
jax: 0.10.0
libtpu: 0.0.40
codegen_flags: <defaults>
</compile_context>

<pallas_src>
import jax
import jax.numpy as jnp
from jax.experimental import pallas as pl
from jax.experimental.pallas import tpu as pltpu

_RADIUS = 0.2  # NOTE: both spheres share this radius; the one-sqrt shortcut
               # in the kernel relies on r1 == r2 (sqrt is monotone).

_LANES = 128
_SUBLANES = 8


def sphere_sdf_kernel(pts_ref, out_ref):
    # pts_ref: [3, rows_tile, 128] f32  (slab 0/1/2 = x/y/z)
    # out_ref: [4, rows_tile, 128] f32  (slab 0 = sdf, slabs 1..3 = r, g, b)
    x = pts_ref[0]
    y = pts_ref[1]
    z = pts_ref[2]

    # Squared distances to the two sphere centers (dense [rows_tile,128] vregs).
    d1sq = (x - 0.5) ** 2 + (y - 0.5) ** 2 + (z - 0.5) ** 2
    d2sq = (x - 0.2) ** 2 + (y - 0.7) ** 2 + (z - 0.3) ** 2

    # r1 == r2 == _RADIUS -> min(sqrt(d1sq)-r, sqrt(d2sq)-r)
    #                      == sqrt(min(d1sq, d2sq)) - r   (one sqrt per point).
    mask = d1sq <= d2sq
    sdf = jnp.sqrt(jnp.minimum(d1sq, d2sq)) - _RADIUS

    out_ref[0] = sdf
    out_ref[1] = jnp.where(mask, 0.1, 0.2)   # red
    out_ref[2] = jnp.where(mask, 0.4, 0.7)   # green
    out_ref[3] = jnp.where(mask, 0.8, 0.3)   # blue


def simple_implicit_model(points_xyz, rows_per_tile=2048):
    """points_xyz: [B, 3] f32 -> (sdf [B, 1], color [B, 3])."""
    B = points_xyz.shape[0]
    points_xyz = points_xyz.astype(jnp.float32)

    # --- tile sizing (bounded padding waste, per-generation VMEM safe) ------
    rows_needed = pl.cdiv(B, _LANES)                       # 128-lane rows to cover B
    n_tiles = max(1, pl.cdiv(rows_needed, rows_per_tile))  # few, big tiles
    # Give the v7x megacore at least 2 tiles when the problem is big enough.
    if n_tiles == 1 and rows_needed >= 64:
        n_tiles = 2
    rows_tile = pl.cdiv(pl.cdiv(rows_needed, n_tiles), _SUBLANES) * _SUBLANES
    rows_total = n_tiles * rows_tile
    b_pad = rows_total * _LANES

    # --- lane-dense input layout [3, rows_total, 128]; pad only the tail ----
    pts_t = points_xyz.T                      # [3, B]
    if b_pad != B:
        pts_t = jnp.pad(pts_t, ((0, 0), (0, b_pad - B)))
    pts_t = pts_t.reshape(3, rows_total, _LANES)

    cost = pl.CostEstimate(
        flops=20 * b_pad,          # subs/squares/adds/min/cmp/selects per point
        transcendentals=b_pad,     # one sqrt per point
        bytes_accessed=28 * b_pad, # 12 B in + 16 B out per point
    )

    packed = pl.pallas_call(
        sphere_sdf_kernel,
        out_shape=jax.ShapeDtypeStruct((4, rows_total, _LANES), jnp.float32),
        grid=(n_tiles,),
        in_specs=[pl.BlockSpec((3, rows_tile, _LANES), lambda i: (0, i, 0))],
        out_specs=pl.BlockSpec((4, rows_tile, _LANES), lambda i: (0, i, 0)),
        compiler_params=pltpu.CompilerParams(
            dimension_semantics=("parallel",),
            vmem_limit_bytes=32 << 20,   # headroom for 2x(in+out) blocks on v5e
        ),
        cost_estimate=cost,
    )(pts_t)

    # Single pass of post-processing: one slice + one transpose.
    out = packed.reshape(4, b_pad)[:, :B].T   # [B, 4]
    sdf = out[:, 0:1]                         # [B, 1]
    color = out[:, 1:4]                       # [B, 3]
    return sdf, color


def _reference(points_xyz):
    # Pure-JAX reference mirroring the PyTorch forward exactly.
    c1 = jnp.array([0.5, 0.5, 0.5], jnp.float32)
    c2 = jnp.array([0.2, 0.7, 0.3], jnp.float32)
    d1 = jnp.linalg.norm(points_xyz - c1, axis=1, keepdims=True) - 0.2
    d2 = jnp.linalg.norm(points_xyz - c2, axis=1, keepdims=True) - 0.2
    sdf = jnp.minimum(d1, d2)
    col1 = jnp.array([0.1, 0.4, 0.8], jnp.float32)
    col2 = jnp.array([0.2, 0.7, 0.3], jnp.float32)
    color = jnp.where(d1 <= d2, col1, col2)
    return sdf, color


if __name__ == "__main__":
    key = jax.random.PRNGKey(0)
    B = 128
    points = jax.random.uniform(key, (B, 3), dtype=jnp.float32)  # [0, 1)^3

    sdf, color = simple_implicit_model(points)
    jax.block_until_ready((sdf, color))

    sdf_ref, color_ref = _reference(points)
    assert sdf.shape == (B, 1) and color.shape == (B, 3)
    assert jnp.allclose(sdf, sdf_ref, atol=1e-5)
    assert jnp.allclose(color, color_ref, atol=1e-6)

    print("KERNEL_OK")
</pallas_src>

<mosaic_0001>
module attributes {stable_mosaic.version = 11 : i64} {
  func.func @sphere_sdf_kernel(%arg0: i32, %arg1: memref<3x8x128xf32, #tpu.memory_space<vmem>>, %arg2: memref<4x8x128xf32, #tpu.memory_space<vmem>>) attributes {dimension_semantics = [#tpu.dimension_semantics<parallel>], iteration_bounds = array<i64: 1>, scalar_prefetch = 0 : i64, scratch_operands = 0 : i64, tpu.core_type = #tpu.core_type<tc>, window_params = [{transform_indices = @transform_0, window_bounds = array<i64: 3, 8, 128>}, {transform_indices = @transform_1, window_bounds = array<i64: 4, 8, 128>}]} {
    %c0 = arith.constant 0 : index
    %c0_0 = arith.constant 0 : index
    %c0_1 = arith.constant 0 : index
    %0 = vector.load %arg1[%c0, %c0_0, %c0_1] : memref<3x8x128xf32, #tpu.memory_space<vmem>>, vector<1x8x128xf32>
    %1 = vector.shape_cast %0 : vector<1x8x128xf32> to vector<8x128xf32>
    %c1 = arith.constant 1 : index
    %c0_2 = arith.constant 0 : index
    %c0_3 = arith.constant 0 : index
    %2 = vector.load %arg1[%c1, %c0_2, %c0_3] : memref<3x8x128xf32, #tpu.memory_space<vmem>>, vector<1x8x128xf32>
    %3 = vector.shape_cast %2 : vector<1x8x128xf32> to vector<8x128xf32>
    %c2 = arith.constant 2 : index
    %c0_4 = arith.constant 0 : index
    %c0_5 = arith.constant 0 : index
    %4 = vector.load %arg1[%c2, %c0_4, %c0_5] : memref<3x8x128xf32, #tpu.memory_space<vmem>>, vector<1x8x128xf32>
    %5 = vector.shape_cast %4 : vector<1x8x128xf32> to vector<8x128xf32>
    %cst = arith.constant 5.000000e-01 : f32
    %6 = vector.broadcast %cst : f32 to vector<8x128xf32>
    %7 = arith.subf %1, %6 : vector<8x128xf32>
    %8 = arith.mulf %7, %7 : vector<8x128xf32>
    %cst_6 = arith.constant 5.000000e-01 : f32
    %9 = vector.broadcast %cst_6 : f32 to vector<8x128xf32>
    %10 = arith.subf %3, %9 : vector<8x128xf32>
    %11 = arith.mulf %10, %10 : vector<8x128xf32>
    %12 = arith.addf %8, %11 : vector<8x128xf32>
    %cst_7 = arith.constant 5.000000e-01 : f32
    %13 = vector.broadcast %cst_7 : f32 to vector<8x128xf32>
    %14 = arith.subf %5, %13 : vector<8x128xf32>
    %15 = arith.mulf %14, %14 : vector<8x128xf32>
    %16 = arith.addf %12, %15 : vector<8x128xf32>
    %cst_8 = arith.constant 2.000000e-01 : f32
    %17 = vector.broadcast %cst_8 : f32 to vector<8x128xf32>
    %18 = arith.subf %1, %17 : vector<8x128xf32>
    %19 = arith.mulf %18, %18 : vector<8x128xf32>
    %cst_9 = arith.constant 0.699999988 : f32
    %20 = vector.broadcast %cst_9 : f32 to vector<8x128xf32>
    %21 = arith.subf %3, %20 : vector<8x128xf32>
    %22 = arith.mulf %21, %21 : vector<8x128xf32>
    %23 = arith.addf %19, %22 : vector<8x128xf32>
    %cst_10 = arith.constant 3.000000e-01 : f32
    %24 = vector.broadcast %cst_10 : f32 to vector<8x128xf32>
    %25 = arith.subf %5, %24 : vector<8x128xf32>
    %26 = arith.mulf %25, %25 : vector<8x128xf32>
    %27 = arith.addf %23, %26 : vector<8x128xf32>
    %28 = arith.cmpf ole, %16, %27 : vector<8x128xf32>
    %29 = arith.minimumf %16, %27 : vector<8x128xf32>
    %30 = math.sqrt %29 : vector<8x128xf32>
    %cst_11 = arith.constant 2.000000e-01 : f32
    %31 = vector.broadcast %cst_11 : f32 to vector<8x128xf32>
    %32 = arith.subf %30, %31 : vector<8x128xf32>
    %c0_12 = arith.constant 0 : index
    %c0_13 = arith.constant 0 : index
    %c0_14 = arith.constant 0 : index
    %33 = vector.load %arg2[%c0_12, %c0_13, %c0_14] : memref<4x8x128xf32, #tpu.memory_space<vmem>>, vector<1x8x128xf32>
    %34 = vector.shape_cast %33 : vector<1x8x128xf32> to vector<8x128xf32>
    %35 = vector.shape_cast %32 : vector<8x128xf32> to vector<1x8x128xf32>
    tpu.vector_store %arg2[%c0_12, %c0_13, %c0_14], %35 {strides = array<i32>} : memref<4x8x128xf32, #tpu.memory_space<vmem>>, vector<1x8x128xf32>,
    %cst_15 = arith.constant 1.000000e-01 : f32
    %cst_16 = arith.constant 2.000000e-01 : f32
    %36 = vector.broadcast %cst_15 : f32 to vector<8x128xf32>
    %37 = vector.broadcast %cst_16 : f32 to vector<8x128xf32>
    %38 = arith.select %28, %36, %37 : vector<8x128xi1>, vector<8x128xf32>
    %c1_17 = arith.constant 1 : index
    %c0_18 = arith.constant 0 : index
    %c0_19 = arith.constant 0 : index
    %39 = vector.load %arg2[%c1_17, %c0_18, %c0_19] : memref<4x8x128xf32, #tpu.memory_space<vmem>>, vector<1x8x128xf32>
    %40 = vector.shape_cast %39 : vector<1x8x128xf32> to vector<8x128xf32>
    %41 = vector.shape_cast %38 : vector<8x128xf32> to vector<1x8x128xf32>
    tpu.vector_store %arg2[%c1_17, %c0_18, %c0_19], %41 {strides = array<i32>} : memref<4x8x128xf32, #tpu.memory_space<vmem>>, vector<1x8x128xf32>,
    %cst_20 = arith.constant 4.000000e-01 : f32
    %cst_21 = arith.constant 0.699999988 : f32
    %42 = vector.broadcast %cst_20 : f32 to vector<8x128xf32>
    %43 = vector.broadcast %cst_21 : f32 to vector<8x128xf32>
    %44 = arith.select %28, %42, %43 : vector<8x128xi1>, vector<8x128xf32>
    %c2_22 = arith.constant 2 : index
    %c0_23 = arith.constant 0 : index
    %c0_24 = arith.constant 0 : index
    %45 = vector.load %arg2[%c2_22, %c0_23, %c0_24] : memref<4x8x128xf32, #tpu.memory_space<vmem>>, vector<1x8x128xf32>
    %46 = vector.shape_cast %45 : vector<1x8x128xf32> to vector<8x128xf32>
    %47 = vector.shape_cast %44 : vector<8x128xf32> to vector<1x8x128xf32>
    tpu.vector_store %arg2[%c2_22, %c0_23, %c0_24], %47 {strides = array<i32>} : memref<4x8x128xf32, #tpu.memory_space<vmem>>, vector<1x8x128xf32>,
    %cst_25 = arith.constant 8.000000e-01 : f32
    %cst_26 = arith.constant 3.000000e-01 : f32
    %48 = vector.broadcast %cst_25 : f32 to vector<8x128xf32>
    %49 = vector.broadcast %cst_26 : f32 to vector<8x128xf32>
    %50 = arith.select %28, %48, %49 : vector<8x128xi1>, vector<8x128xf32>
    %c3 = arith.constant 3 : index
    %c0_27 = arith.constant 0 : index
    %c0_28 = arith.constant 0 : index
    %51 = vector.load %arg2[%c3, %c0_27, %c0_28] : memref<4x8x128xf32, #tpu.memory_space<vmem>>, vector<1x8x128xf32>
    %52 = vector.shape_cast %51 : vector<1x8x128xf32> to vector<8x128xf32>
    %53 = vector.shape_cast %50 : vector<8x128xf32> to vector<1x8x128xf32>
    tpu.vector_store %arg2[%c3, %c0_27, %c0_28], %53 {strides = array<i32>} : memref<4x8x128xf32, #tpu.memory_space<vmem>>, vector<1x8x128xf32>,
    return
  }
  func.func @transform_0(%arg0: i32) -> (i32, i32, i32) {
    %c0_i32 = arith.constant 0 : i32
    %c0_i32_0 = arith.constant 0 : i32
    %c0_i32_1 = arith.constant 0 : i32
    return %c0_i32, %arg0, %c0_i32_0 : i32, i32, i32
  }
  func.func @transform_1(%arg0: i32) -> (i32, i32, i32) {
    %c0_i32 = arith.constant 0 : i32
    %c0_i32_0 = arith.constant 0 : i32
    %c0_i32_1 = arith.constant 0 : i32
    return %c0_i32, %arg0, %c0_i32_0 : i32, i32, i32
  }
}

</mosaic_0001>

<llo_original>
// kernel: tpu_custom_call.1
$region0: #{tpu_custom_call.1}
  #allocation0 [shape = 'u32[]', space=smem, size = 0x4, offset = 0x4, fixed_abs, tag = 'smem constant byte address 0x4 - core index']
  #allocation1 [shape = 'u32[144,128]{1,0:T(1,128)}', space=vmem, size = 0x12000, scoped, tag = 'internal scratch']
  %s0 = inlined_call_operand.hbm [shape: f32[3,8,128], index: 0, kind: input, shape index: {}]
  %s1 = inlined_call_operand.hbm [shape: f32[4,8,128], index: 1, kind: output, shape index: {}]
  %s2 = sld [smem:[#allocation0]]
  $region18: #{tpu_custom_call.1} parent=0
    _
  %s4 = ssub.s32 1, %s2
  %s5 = scalar_select 0, %s4, %s2
  $region1: #{tpu_custom_call.1} parent=0
    #allocation2 [shape = 'u8[12288]{0}', space=vmem, size = 0x3000, scoped, tag = 'input window, operand 0, single buffered']
    #allocation3 [shape = 's32[1]{0}', space=sflag, size = 0x4, scoped, tag = 'scoped memory for tpu_custom_call.1']
    #allocation4 [shape = 's32[1]{0}', space=sflag, size = 0x4, scoped, tag = 'scoped memory for tpu_custom_call.1']
    #allocation5 [shape = 'u8[16384]{0}', space=vmem, size = 0x4000, scoped, tag = 'output window, operand 0, single buffered']
    %6 = vsyncpa [#allocation3], 0
    %7 = vsyncpa [#allocation4], 0
    // Predicated region
    $region2: #{tpu_custom_call.1} parent=1 // pred_check
      _
    $region3: #{tpu_custom_call.1} parent=1 // pred_check_branch
      %9 = sbr.rel (0) target = $region5
    $region4: #{tpu_custom_call.1} parent=1 // pred_region
      %s11 = ssub.s32 384, 384
      %12 = vsyncadd [#allocation3], %s11
      %s13 = sshll.u32 [#allocation2], 4
      %s14 = int_to_ptr.vmem [resolvable:$true] %s13
      %19 = dma.hbm_to_vmem [thread:$0]  %s0, 384, %s14, [#allocation3], 128, 128, 8
    $region5: #{tpu_custom_call.1} parent=1 // pred_fallthru
      _
    // Predicated region
    $region6: #{tpu_custom_call.1} parent=1 // pred_check
      _
    $region7: #{tpu_custom_call.1} parent=1 // pred_check_branch
      %21 = sbr.rel (0) target = $region9
    $region8: #{tpu_custom_call.1} parent=1 // pred_region
      %22 = dma.done [#allocation3], 384
    $region9: #{tpu_custom_call.1} parent=1 // pred_fallthru
      _
    %v23 = vld [vmem:[#allocation2] sm:$0xff]
    %s24 = scalar_lea.vmem [#allocation2], 8
    %v25 = vld [vmem:[%s24] sm:$0xff]
    %s26 = scalar_lea.vmem [#allocation2], 16
    %v27 = vld [vmem:[%s26] sm:$0xff]
    %v28 = vsub.f32 %v23, 0.5
    %v29 = vmul.f32 %v28, %v28
    %v30 = vsub.f32 %v25, 0.5
    %v31 = vmul.f32 %v30, %v30
    %v32 = vadd.f32 %v29, %v31
    %v33 = vsub.f32 %v27, 0.5
    %v34 = vmul.f32 %v33, %v33
    %v35 = vadd.f32 %v32, %v34
    %v36 = vsub.f32 %v23, 0.2
    %v37 = vmul.f32 %v36, %v36
    %v38 = vsub.f32 %v25, 0.7
    %v39 = vmul.f32 %v38, %v38
    %v40 = vadd.f32 %v37, %v39
    %v41 = vsub.f32 %v27, 0.3
    %v42 = vmul.f32 %v41, %v41
    %v43 = vadd.f32 %v40, %v42
    %vm44 = vcmp.le.f32.partialorder %v35, %v43
    %v45 = vmin.f32 %v35, %v43
    %v46 = vrsqrt.pop %v45
    %v47 = vmul.f32 %v45, %v46
    %vm48 = vcmp.eq.f32.partialorder %v45, inf
    %v49 = vsel %vm48, %v45, %v47
    %vm50 = vcmp.eq.f32.partialorder %v45, 0.0
    %v51 = vand.u32 %v45, 2147483648
    %v52 = vsel %vm50, %v51, %v49
    %v53 = vsub.f32 %v52, 0.2
    %54 = vst [vmem:[#allocation5] sm:$0xff] %v53
    %v55 = vsel %vm44, 0.1, 0.2
    %s56 = scalar_lea.vmem [#allocation5], 8
    %57 = vst [vmem:[%s56] sm:$0xff] %v55
    %v58 = vsel %vm44, 0.4, 0.7
    %s59 = scalar_lea.vmem [#allocation5], 16
    %60 = vst [vmem:[%s59] sm:$0xff] %v58
    %v61 = vsel %vm44, 0.8, 0.3
    %s62 = scalar_lea.vmem [#allocation5], 24
    %63 = vst [vmem:[%s62] sm:$0xff] %v61
    // Predicated region
    $region10: #{tpu_custom_call.1} parent=1 // pred_check
      _
    $region11: #{tpu_custom_call.1} parent=1 // pred_check_branch
      %65 = sbr.rel (0) target = $region13
    $region12: #{tpu_custom_call.1} parent=1 // pred_region
      %s67 = ssub.s32 512, 512
      %68 = vsyncadd [#allocation4], %s67
      %s69 = sshll.u32 [#allocation5], 4
      %s70 = int_to_ptr.vmem [resolvable:$true] %s69
      %75 = dma.vmem_to_hbm [thread:$0]  %s70, 512, %s1, [#allocation4], 128, 128, 8
    $region13: #{tpu_custom_call.1} parent=1 // pred_fallthru
      _
    // Predicated region
    $region14: #{tpu_custom_call.1} parent=1 // pred_check
      _
    $region15: #{tpu_custom_call.1} parent=1 // pred_check_branch
      %77 = sbr.rel (0) target = $region17
    $region16: #{tpu_custom_call.1} parent=1 // pred_region
      %78 = dma.done [#allocation4], 512
    $region17: #{tpu_custom_call.1} parent=1 // pred_fallthru
      _
    %79 = vsyncpa [#allocation3], 1
    %80 = vsyncpa [#allocation4], 1

</llo_original>
